<compile_context>
chip_gen: v7x
topology: tpu7x:2x2x1
jax: 0.10.0
libtpu: 0.0.40
codegen_flags: <defaults>
</compile_context>

<pallas_src>
import math
from functools import partial

import jax
import jax.numpy as jnp
from jax.experimental import pallas as pl
from jax.experimental.pallas import tpu as pltpu


# "NT" dimension numbers: contract the last dim of both operands (a @ b.T).
_NT_DIMS = (((1,), (1,)), ((), ()))


def _cdiv(a: int, b: int) -> int:
    return -(-a // b)


def _round_up(x: int, m: int) -> int:
    return _cdiv(x, m) * m


def _tpu_generation():
    """Best-effort TPU generation from device_kind; None if unknown."""
    try:
        kind = jax.devices()[0].device_kind.lower()
    except Exception:
        return None
    for tag, gen in (("v7", 7), ("v6", 6), ("v5", 5), ("v4", 4)):
        if tag in kind:
            return gen
    return None


def _default_act_in_bf16(gen=None) -> bool:
    gen = _tpu_generation() if gen is None else gen
    return gen is not None and gen >= 6          # bf16 EUP exists on v6e / v7x


def _critic_kernel(x_ref, *refs, n_hidden, act_in_bf16):
    """One batch tile of the critic MLP.

    x_ref  : (TILE_B, D) obs tile in its native layout (f32 or bf16).
    refs   : (w_0, b_0, ..., w_{n-1}, b_{n-1}, w_out, b_out, out_ref)
             hidden w_i : (H_out, H_in) bf16,  b_i : (H_out, 1) f32
             n_hidden>0: w_out (H_last, 1) f32, b_out (1, 1) f32
             n_hidden=0: w_out (1, D) bf16,     b_out (1, 1) f32
    out_ref: (1, TILE_B) f32 -- batch on lanes, lane-dense store.
    """
    out_ref = refs[-1]
    act_dtype = jnp.bfloat16 if act_in_bf16 else jnp.float32
    # Single cast feeds the bf16 MXU path; accumulation stays f32.
    x = x_ref[...].astype(jnp.bfloat16)                       # (TILE_B, D)

    if n_hidden == 0:
        # Default config hidden_sizes=(32,): a single Linear(D, 1).
        w = refs[0][...]                                      # (1, D) bf16
        b = refs[1][...]                                      # (1, 1) f32
        v = jax.lax.dot_general(w, x, _NT_DIMS,
                                preferred_element_type=jnp.float32) + b
    else:
        # Layer 0 fuses the batch->lanes flip: (H0, D) . (TILE_B, D)^T -> (H0, TILE_B)
        w0 = refs[0][...]                                     # (H0, D) bf16
        b0 = refs[1][...]                                     # (H0, 1) f32
        acc = jax.lax.dot_general(w0, x, _NT_DIMS,
                                  preferred_element_type=jnp.float32)
        h = jnp.tanh((acc + b0).astype(act_dtype)).astype(jnp.bfloat16)
        for i in range(1, n_hidden):
            w = refs[2 * i][...]                              # (H_i, H_{i-1}) bf16
            b = refs[2 * i + 1][...]                          # (H_i, 1) f32
            acc = jnp.dot(w, h, preferred_element_type=jnp.float32)
            h = jnp.tanh((acc + b).astype(act_dtype)).astype(jnp.bfloat16)
        # Final 1-unit layer: VPU multiply + sublane reduction (no M=1 matmul).
        w_out = refs[2 * n_hidden][...]                       # (H_last, 1) f32
        b_out = refs[2 * n_hidden + 1][...]                   # (1, 1) f32
        v = jnp.sum(w_out * h.astype(jnp.float32), axis=0, keepdims=True) + b_out

    out_ref[...] = v.astype(out_ref.dtype)                    # (1, TILE_B)


def critic_head_forward(obs: jax.Array, params, *, tile_b_max: int | None = None,
                        act_in_bf16: bool | None = None) -> jax.Array:
    """Run the full MLP critic head in one Pallas call. Returns shape (B,).

    `params` is a list of (W_pt, b) with PyTorch layout: W_pt (out, in), b (out,).
    obs is consumed as-is ((B, D), any float dtype) -- no wrapper-side copy.
    """
    B, D = obs.shape
    n_layers = len(params)
    n_hidden = n_layers - 1

    gen = _tpu_generation()
    if act_in_bf16 is None:
        act_in_bf16 = _default_act_in_bf16(gen)

    # --- generation-aware tiling (amortize ~0.35us/grid-step; respect VMEM) ---
    if tile_b_max is None:
        if gen == 7:
            tile_b_max = 16 * 1024        # 64 MiB physical VMEM on v7x
        elif gen in (5, 6):
            tile_b_max = 32 * 1024        # 128 MiB VMEM: bigger tiles amortize overhead
        else:
            tile_b_max = 8 * 1024         # conservative default
    if gen == 7:
        vmem_limit = 32 << 20
    elif gen in (5, 6):
        vmem_limit = 64 << 20
    else:
        vmem_limit = None                 # compiler default

    # Number of batch tiles: enough to cover B; on v7x force >=2 (even) steps
    # so the 'parallel' grid axis is actually split across both TensorCores.
    nt = max(1, _cdiv(B, tile_b_max))
    if gen == 7 and B >= 256:
        nt = max(nt, 2)
        nt += nt % 2
    # Minimal padding: tile is the lane-rounded even split of B across nt tiles.
    tile_b = max(128, _round_up(_cdiv(B, nt), 128))
    nt = _cdiv(B, tile_b)                 # drop tiles that would be fully OOB
    B_pad = nt * tile_b

    # --- operand prep: only the tiny weights are touched on the host ----------
    obs_spec = pl.BlockSpec((tile_b, D), lambda i: (i, 0))
    if nt >= 4 and tile_b <= 4096:
        # Small tiles: deepen input buffering to hide DMA issue latency.
        obs_spec = pl.BlockSpec((tile_b, D), lambda i: (i, 0),
                                pipeline_mode=pl.Buffered(3))
    in_specs = [obs_spec]
    flat = []
    for li, (w_pt, b) in enumerate(params):
        if li < n_hidden:
            w_k = w_pt.astype(jnp.bfloat16)                 # (out, in) bf16 for MXU
            b_k = b.astype(jnp.float32).reshape(-1, 1)      # (out, 1) f32
        elif n_hidden == 0:
            w_k = w_pt.astype(jnp.bfloat16)                 # (1, D) bf16 (dot_general)
            b_k = b.astype(jnp.float32).reshape(1, 1)
        else:
            w_k = w_pt.astype(jnp.float32).T                # (H_last, 1) f32 (VPU reduce)
            b_k = b.astype(jnp.float32).reshape(1, 1)
        flat += [w_k, b_k]
        in_specs += [pl.BlockSpec(w_k.shape, lambda i: (0, 0)),   # VMEM-resident
                     pl.BlockSpec(b_k.shape, lambda i: (0, 0))]

    # --- advisory cost estimate (mem-bound custom call) ------------------------
    flops = 2 * B * sum(int(w.shape[0]) * int(w.shape[1]) for (w, _) in params)
    transcendentals = B * sum(int(params[i][0].shape[0]) for i in range(n_hidden))
    bytes_accessed = (B * D * obs.dtype.itemsize
                      + sum(int(a.size) * a.dtype.itemsize for a in flat)
                      + B_pad * 4)
    cost = pl.CostEstimate(flops=flops, transcendentals=transcendentals,
                           bytes_accessed=bytes_accessed)

    out = pl.pallas_call(
        partial(_critic_kernel, n_hidden=n_hidden, act_in_bf16=act_in_bf16),
        out_shape=jax.ShapeDtypeStruct((1, B_pad), jnp.float32),
        grid=(nt,),
        in_specs=in_specs,
        out_specs=pl.BlockSpec((1, tile_b), lambda i: (0, i)),
        compiler_params=pltpu.CompilerParams(
            dimension_semantics=("parallel",),       # megacore sharding on v7x
            vmem_limit_bytes=vmem_limit),
        cost_estimate=cost,
    )(obs, *flat)

    # squeeze(-1) + drop batch padding: glue, not compute.
    return out[0, :B]


def init_critic_params(key, hidden_sizes=(32,), init_layers_orthogonal=True,
                       final_layer_gain=1.0):
    """Matches CriticHead.__init__ (PyTorch layout W:(out,in), b:(out,))."""
    layer_sizes = tuple(hidden_sizes) + (1,)
    params = []
    for i in range(len(layer_sizes) - 1):
        d_in, d_out = layer_sizes[i], layer_sizes[i + 1]
        key, sub = jax.random.split(key)
        gain = final_layer_gain if i == len(layer_sizes) - 2 else math.sqrt(2.0)
        if init_layers_orthogonal:
            w_pt = jax.nn.initializers.orthogonal(scale=gain)(
                sub, (d_out, d_in), jnp.float32)
        else:
            bound = 1.0 / math.sqrt(d_in)
            w_pt = jax.random.uniform(sub, (d_out, d_in), jnp.float32, -bound, bound)
        b = jnp.zeros((d_out,), jnp.float32)
        params.append((w_pt, b))
    return params


def critic_head_reference(obs, params):
    """Pure-JAX f32 reference of the PyTorch forward."""
    h = obs
    n = len(params)
    for i, (w_pt, b) in enumerate(params):
        h = h @ w_pt.T + b
        if i < n - 1:
            h = jnp.tanh(h)
    return h[:, 0]


def critic_head_reference_quantized(obs, params, *, act_in_bf16):
    """Reference that mimics the kernel's bf16 rounding points (f32 accumulation)."""
    bf = lambda a: a.astype(jnp.bfloat16).astype(jnp.float32)
    n_hidden = len(params) - 1
    h = bf(obs)
    for i, (w, b) in enumerate(params):
        if i < n_hidden:
            pre = h @ bf(w).T + b
            if act_in_bf16:
                pre = bf(pre)
            h = bf(jnp.tanh(pre))
        elif n_hidden == 0:
            h = h @ bf(w).T + b
        else:
            h = h @ w.T + b                     # final weight stays f32 in kernel
    return h[:, 0]


if __name__ == "__main__":
    key = jax.random.PRNGKey(0)
    k_obs, k_p1, k_p2 = jax.random.split(key, 3)

    B, D = 8, 32
    obs = jax.random.normal(k_obs, (B, D), jnp.float32)

    gen = _tpu_generation()
    act_bf16 = _default_act_in_bf16(gen)

    configs = (("mlp", (32, 32), k_p1),      # Linear+Tanh -> Linear+Tanh? no: hidden+final
               ("linear", (32,), k_p2))      # default CriticHead: single Linear(32, 1)
    for name, hidden_sizes, kp in configs:
        params = init_critic_params(kp, hidden_sizes=hidden_sizes,
                                    init_layers_orthogonal=True, final_layer_gain=1.0)
        v = jax.block_until_ready(critic_head_forward(obs, params))
        assert v.shape == (B,), (name, v.shape)

        # Tight check vs. a reference with the same bf16 rounding points (isolates
        # kernel math); loose check vs. the pure-f32 PyTorch-equivalent reference.
        v_ref_q = critic_head_reference_quantized(obs, params, act_in_bf16=act_bf16)
        v_ref = critic_head_reference(obs, params)
        assert jnp.allclose(v, v_ref_q, atol=2e-2, rtol=2e-2), (name, v, v_ref_q)
        assert jnp.allclose(v, v_ref, atol=6e-2, rtol=6e-2), (name, v, v_ref)

    print("KERNEL_OK")
</pallas_src>

<mosaic_0001>
module attributes {stable_mosaic.version = 11 : i64} {
  func.func @_critic_kernel(%arg0: i32, %arg1: memref<128x32xf32, #tpu.memory_space<vmem>>, %arg2: memref<32x32xbf16, #tpu.memory_space<vmem>>, %arg3: memref<32x1xf32, #tpu.memory_space<vmem>>, %arg4: memref<32x1xf32, #tpu.memory_space<vmem>>, %arg5: memref<1x1xf32, #tpu.memory_space<vmem>>, %arg6: memref<1x128xf32, #tpu.memory_space<vmem>>) attributes {dimension_semantics = [#tpu.dimension_semantics<parallel>], iteration_bounds = array<i64: 1>, scalar_prefetch = 0 : i64, scratch_operands = 0 : i64, tpu.core_type = #tpu.core_type<tc>, window_params = [{transform_indices = @transform_0, window_bounds = array<i64: 128, 32>}, {pipeline_mode = #tpu.pipeline_mode<synchronous>, transform_indices = @transform_1, window_bounds = array<i64: 32, 32>}, {pipeline_mode = #tpu.pipeline_mode<synchronous>, transform_indices = @transform_2, window_bounds = array<i64: 32, 1>}, {pipeline_mode = #tpu.pipeline_mode<synchronous>, transform_indices = @transform_3, window_bounds = array<i64: 32, 1>}, {pipeline_mode = #tpu.pipeline_mode<synchronous>, transform_indices = @transform_4, window_bounds = array<i64: 1, 1>}, {transform_indices = @transform_5, window_bounds = array<i64: 1, 128>}]} {
    %c0 = arith.constant 0 : index
    %c0_0 = arith.constant 0 : index
    %0 = vector.load %arg1[%c0, %c0_0] : memref<128x32xf32, #tpu.memory_space<vmem>>, vector<128x32xf32>
    %1 = arith.truncf %0 : vector<128x32xf32> to vector<128x32xbf16>
    %c0_1 = arith.constant 0 : index
    %c0_2 = arith.constant 0 : index
    %2 = vector.load %arg2[%c0_1, %c0_2] : memref<32x32xbf16, #tpu.memory_space<vmem>>, vector<32x32xbf16>
    %c0_3 = arith.constant 0 : index
    %c0_4 = arith.constant 0 : index
    %3 = vector.load %arg3[%c0_3, %c0_4] : memref<32x1xf32, #tpu.memory_space<vmem>>, vector<32x1xf32>
    %cst = arith.constant dense<0.000000e+00> : vector<32x128xf32>
    %4 = tpu.matmul %2, %1, %cst {dimension_numbers = #tpu.dot_dimension_numbers<[1], [1], [0], [0], [0, 0, 1, 0], [], []>} : vector<32x32xbf16>, vector<128x32xbf16>, vector<32x128xf32> -> vector<32x128xf32>
    %5 = vector.broadcast %3 : vector<32x1xf32> to vector<32x128xf32>
    %6 = arith.addf %4, %5 : vector<32x128xf32>
    %7 = math.tanh %6 : vector<32x128xf32>
    %8 = arith.truncf %7 : vector<32x128xf32> to vector<32x128xbf16>
    %c0_5 = arith.constant 0 : index
    %c0_6 = arith.constant 0 : index
    %9 = vector.load %arg4[%c0_5, %c0_6] : memref<32x1xf32, #tpu.memory_space<vmem>>, vector<32x1xf32>
    %c0_7 = arith.constant 0 : index
    %c0_8 = arith.constant 0 : index
    %10 = vector.load %arg5[%c0_7, %c0_8] : memref<1x1xf32, #tpu.memory_space<vmem>>, vector<1x1xf32>
    %11 = arith.extf %8 : vector<32x128xbf16> to vector<32x128xf32>
    %12 = vector.broadcast %9 : vector<32x1xf32> to vector<32x128xf32>
    %13 = arith.mulf %12, %11 : vector<32x128xf32>
    %cst_9 = arith.constant dense<0.000000e+00> : vector<128xf32>
    %14 = vector.multi_reduction <add>, %13, %cst_9 [0] : vector<32x128xf32> to vector<128xf32>
    %15 = vector.shape_cast %14 : vector<128xf32> to vector<1x128xf32>
    %16 = vector.broadcast %10 : vector<1x1xf32> to vector<1x128xf32>
    %17 = arith.addf %15, %16 : vector<1x128xf32>
    %c0_10 = arith.constant 0 : index
    %c0_11 = arith.constant 0 : index
    %18 = vector.load %arg6[%c0_10, %c0_11] : memref<1x128xf32, #tpu.memory_space<vmem>>, vector<1x128xf32>
    tpu.vector_store %arg6[%c0_10, %c0_11], %17 {strides = array<i32>} : memref<1x128xf32, #tpu.memory_space<vmem>>, vector<1x128xf32>,
    return
  }
  func.func @transform_0(%arg0: i32) -> (i32, i32) {
    %c0_i32 = arith.constant 0 : i32
    %c0_i32_0 = arith.constant 0 : i32
    return %arg0, %c0_i32 : i32, i32
  }
  func.func @transform_1(%arg0: i32) -> (i32, i32) {
    %c0_i32 = arith.constant 0 : i32
    %c0_i32_0 = arith.constant 0 : i32
    %c0_i32_1 = arith.constant 0 : i32
    return %c0_i32, %c0_i32_0 : i32, i32
  }
  func.func @transform_2(%arg0: i32) -> (i32, i32) {
    %c0_i32 = arith.constant 0 : i32
    %c0_i32_0 = arith.constant 0 : i32
    %c0_i32_1 = arith.constant 0 : i32
    return %c0_i32, %c0_i32_0 : i32, i32
  }
  func.func @transform_3(%arg0: i32) -> (i32, i32) {
    %c0_i32 = arith.constant 0 : i32
    %c0_i32_0 = arith.constant 0 : i32
    %c0_i32_1 = arith.constant 0 : i32
    return %c0_i32, %c0_i32_0 : i32, i32
  }
  func.func @transform_4(%arg0: i32) -> (i32, i32) {
    %c0_i32 = arith.constant 0 : i32
    %c0_i32_0 = arith.constant 0 : i32
    %c0_i32_1 = arith.constant 0 : i32
    return %c0_i32, %c0_i32_0 : i32, i32
  }
  func.func @transform_5(%arg0: i32) -> (i32, i32) {
    %c0_i32 = arith.constant 0 : i32
    %c0_i32_0 = arith.constant 0 : i32
    return %c0_i32, %arg0 : i32, i32
  }
}

</mosaic_0001>

<llo_original>
// kernel: tpu_custom_call.1
$region0: #{tpu_custom_call.1}
  #allocation0 [shape = 'u32[]', space=smem, size = 0x4, offset = 0x4, fixed_abs, tag = 'smem constant byte address 0x4 - core index']
  #allocation1 [shape = 'u32[144,128]{1,0:T(1,128)}', space=vmem, size = 0x12000, scoped, tag = 'internal scratch']
  #allocation2 [shape = 'f32[1,1]{1,0:T(1,128)S(1)}', space=vmem, size = 0x200, scoped, tag = 'scoped memory for tpu_custom_call.1']
  %s0 = inlined_call_operand.vmem [shape: f32[8,32], index: 0, kind: input, shape index: {}]
  %s1 = inlined_call_operand.vmem [shape: bf16[32,32], index: 1, kind: input, shape index: {}]
  %s2 = inlined_call_operand.vmem [shape: f32[32,1], index: 2, kind: input, shape index: {}]
  %s3 = inlined_call_operand.vmem [shape: f32[32,1], index: 3, kind: input, shape index: {}]
  %s4 = inlined_call_operand.<no memory space> [shape: f32[1,1], index: 4, kind: input, shape index: {}]
  %s5 = inlined_call_operand.hbm [shape: f32[1,128], index: 5, kind: output, shape index: {}]
  %s6 = sld [smem:[#allocation0]]
  $region30: #{tpu_custom_call.1} parent=0
    _
  %s8 = ssub.s32 1, %s6
  %s9 = scalar_select 0, %s8, %s6
  %v10 = vstv %s4
  %11 = vst [vmem:[#allocation2] sm:$0x1] %v10
  $region1: #{tpu_custom_call.1} parent=0
    #allocation3 [shape = 'u8[512]{0}', space=vmem, size = 0x400, scoped, tag = 'output window, operand 0, single buffered']
    #allocation4 [shape = 's32[1]{0}', space=sflag, size = 0x4, scoped, tag = 'scoped memory for tpu_custom_call.1']
    %12 = vsyncpa [#allocation4], 0
    // Predicated region
    $region2: #{tpu_custom_call.1} parent=1 // pred_check
      _
    $region3: #{tpu_custom_call.1} parent=1 // pred_check_branch
      %14 = sbr.rel (0) target = $region5
    $region4: #{tpu_custom_call.1} parent=1 // pred_region
      _
    $region5: #{tpu_custom_call.1} parent=1 // pred_fallthru
      _
    // Predicated region
    $region6: #{tpu_custom_call.1} parent=1 // pred_check
      _
    $region7: #{tpu_custom_call.1} parent=1 // pred_check_branch
      %16 = sbr.rel (0) target = $region9
    $region8: #{tpu_custom_call.1} parent=1 // pred_region
      _
    $region9: #{tpu_custom_call.1} parent=1 // pred_fallthru
      _
    // Predicated region
    $region10: #{tpu_custom_call.1} parent=1 // pred_check
      _
    $region11: #{tpu_custom_call.1} parent=1 // pred_check_branch
      %18 = sbr.rel (0) target = $region13
    $region12: #{tpu_custom_call.1} parent=1 // pred_region
      _
    $region13: #{tpu_custom_call.1} parent=1 // pred_fallthru
      _
    // Predicated region
    $region14: #{tpu_custom_call.1} parent=1 // pred_check
      _
    $region15: #{tpu_custom_call.1} parent=1 // pred_check_branch
      %20 = sbr.rel (0) target = $region17
    $region16: #{tpu_custom_call.1} parent=1 // pred_region
      _
    $region17: #{tpu_custom_call.1} parent=1 // pred_fallthru
      _
    // Predicated region
    $region18: #{tpu_custom_call.1} parent=1 // pred_check
      _
    $region19: #{tpu_custom_call.1} parent=1 // pred_check_branch
      %22 = sbr.rel (0) target = $region21
    $region20: #{tpu_custom_call.1} parent=1 // pred_region
      _
    $region21: #{tpu_custom_call.1} parent=1 // pred_fallthru
      _
    %v24 = vld [vmem:[%s0] sm:$0xff]
    %v25 = vld [vmem:[%s0 + $0x8] sm:$0xff]
    %v26 = vld [vmem:[%s0 + $0x10] sm:$0xff]
    %v27 = vld [vmem:[%s0 + $0x18] sm:$0xff]
    %v28 = vld [vmem:[%s0 + $0x20] sm:$0xff]
    %v29 = vld [vmem:[%s0 + $0x28] sm:$0xff]
    %v30 = vld [vmem:[%s0 + $0x30] sm:$0xff]
    %v31 = vld [vmem:[%s0 + $0x38] sm:$0xff]
    %v32 = vld [vmem:[%s0 + $0x40] sm:$0xff]
    %v33 = vld [vmem:[%s0 + $0x48] sm:$0xff]
    %v34 = vld [vmem:[%s0 + $0x50] sm:$0xff]
    %v35 = vld [vmem:[%s0 + $0x58] sm:$0xff]
    %v36 = vld [vmem:[%s0 + $0x60] sm:$0xff]
    %v37 = vld [vmem:[%s0 + $0x68] sm:$0xff]
    %v38 = vld [vmem:[%s0 + $0x70] sm:$0xff]
    %v39 = vld [vmem:[%s0 + $0x78] sm:$0xff]
    %v40 = vpack.c.bf16 %v25, %v24
    %v41 = vpack.c.bf16 %v27, %v26
    %v42 = vpack.c.bf16 %v29, %v28
    %v43 = vpack.c.bf16 %v31, %v30
    %v44 = vpack.c.bf16 %v33, %v32
    %v45 = vpack.c.bf16 %v35, %v34
    %v46 = vpack.c.bf16 %v37, %v36
    %v47 = vpack.c.bf16 %v39, %v38
    %v48 = vld [vmem:[%s1] sm:$0xf]
    %v49 = vld [vmem:[%s1 + $0x4] sm:$0xf]
    %v50 = vld [vmem:[%s1 + $0x8] sm:$0xf]
    %v51 = vld [vmem:[%s1 + $0xc] sm:$0xf]
    %v52 = vld [vmem:[%s2] sm:$0xff]
    %v53 = vld [vmem:[%s2 + $0x8] sm:$0xff]
    %v54 = vld [vmem:[%s2 + $0x10] sm:$0xff]
    %v55 = vld [vmem:[%s2 + $0x18] sm:$0xff]
    %57 = vset.pattern.permute.xlu0 0
    %58 = vperm.xlu0 %57, %v52
    %v59 = vpop.permute.xlu0 %58
    %62 = vset.pattern.permute.xlu0 0
    %63 = vperm.xlu0 %62, %v53
    %v64 = vpop.permute.xlu0 %63
    %67 = vset.pattern.permute.xlu0 0
    %68 = vperm.xlu0 %67, %v54
    %v69 = vpop.permute.xlu0 %68
    %72 = vset.pattern.permute.xlu0 0
    %73 = vperm.xlu0 %72, %v55
    %v74 = vpop.permute.xlu0 %73
    %v80 = vunpack.c.l.b16 %v48
    %v81 = vunpack.c.l.b16 %v49
    %v82 = vunpack.c.l.b16 %v50
    %v83 = vunpack.c.l.b16 %v51
    %v84 = vpack.c.b16 %v81, %v80
    %v85 = vpack.c.b16 %v83, %v82
    %vm86 = vcmask 261120
    %v88 = vsel %vm86, %v84, 0
    %v91 = vsel %vm86, %v85, 0
    %v94 = vsel %vm86, %v40, 0
    %v97 = vsel %vm86, %v41, 0
    %v100 = vsel %vm86, %v42, 0
    %v103 = vsel %vm86, %v43, 0
    %v106 = vsel %vm86, %v44, 0
    %v109 = vsel %vm86, %v45, 0
    %v112 = vsel %vm86, %v46, 0
    %v115 = vsel %vm86, %v47, 0
    %117 = vmatprep.subr.bf16.mxu0 0
    %118 = vmatpush1.bf16.xpose.msra.mxu0 %v94
    %119 = vmatprep.subr.bf16.mxu0 0
    %120 = vmatpush1.bf16.xpose.msra.mxu0 %v97
    %121 = vmatprep.subr.bf16.mxu0 0
    %122 = vmatpush1.bf16.xpose.msra.mxu0 %v100
    %123 = vmatprep.subr.bf16.mxu0 0
    %124 = vmatpush1.bf16.xpose.msra.mxu0 %v103
    %125 = vmatprep.subr.bf16.mxu0 0
    %126 = vmatpush1.bf16.xpose.msra.mxu0 %v106
    %127 = vmatprep.subr.bf16.mxu0 0
    %128 = vmatpush1.bf16.xpose.msra.mxu0 %v109
    %129 = vmatprep.subr.bf16.mxu0 0
    %130 = vmatpush1.bf16.xpose.msra.mxu0 %v112
    %131 = vmatprep.subr.bf16.mxu0 0
    %132 = vmatpush1.bf16.xpose.msra.mxu0 %v115
    %133 = vmatprep.subr.bf16.mxu0 0
    %134 = vmatpush1.bf16.xpose.msra.mxu0 0
    %135 = vmatprep.subr.bf16.mxu0 0
    %136 = vmatpush1.bf16.xpose.msra.mxu0 0
    %137 = vmatprep.subr.bf16.mxu0 0
    %138 = vmatpush1.bf16.xpose.msra.mxu0 0
    %139 = vmatprep.subr.bf16.mxu0 0
    %140 = vmatpush1.bf16.xpose.msra.mxu0 0
    %141 = vmatprep.subr.bf16.mxu0 0
    %142 = vmatpush1.bf16.xpose.msra.mxu0 0
    %143 = vmatprep.subr.bf16.mxu0 0
    %144 = vmatpush1.bf16.xpose.msra.mxu0 0
    %145 = vmatprep.subr.bf16.mxu0 0
    %146 = vmatpush1.bf16.xpose.msra.mxu0 0
    %147 = vmatprep.subr.bf16.mxu0 0
    %148 = vmatpush1.bf16.xpose.msra.mxu0 0
    %149 = vmatprep.mubr.bf16.mxu0 0
    %150 = vmatmul.mubr.bf16.gmra.mrb[0].mxu0 %v88
    %v151 = vpop.f32.mrb[0].mxu0
    %v152 = vadd.f32 %v59, %v151
    %v153 = vpop.f32.mrb[0].mxu0
    %v154 = vpop.f32.mrb[0].mxu0
    %v155 = vadd.f32 %v64, %v154
    %v156 = vpop.f32.mrb[0].mxu0
    %157 = vmatprep.mubr.bf16.mxu0 0
    %158 = vmatmul.mubr.bf16.gmra.mrb[0].mxu0 %v91
    %v159 = vpop.f32.mrb[0].mxu0
    %v160 = vadd.f32 %v69, %v159
    %v161 = vpop.f32.mrb[0].mxu0
    %v162 = vpop.f32.mrb[0].mxu0
    %v163 = vadd.f32 %v74, %v162
    %v164 = vpop.f32.mrb[0].mxu0
    %165 = vdwg.mxu0
    %v166 = vtanh.pop %v152
    %v167 = vtanh.pop %v155
    %v168 = vtanh.pop %v160
    %v169 = vtanh.pop %v163
    %v170 = vpack.c.bf16 %v167, %v166
    %v171 = vpack.c.bf16 %v169, %v168
    %v172 = vld [vmem:[%s3] sm:$0xff]
    %v173 = vld [vmem:[%s3 + $0x8] sm:$0xff]
    %v174 = vld [vmem:[%s3 + $0x10] sm:$0xff]
    %v175 = vld [vmem:[%s3 + $0x18] sm:$0xff]
    %v176 = vld [vmem:[#allocation2] sm:$0x1]
    %v177 = vunpack.c.l.bf16 %v170
    %v178 = vunpack.c.h.bf16 %v170
    %v179 = vunpack.c.l.bf16 %v171
    %v180 = vunpack.c.h.bf16 %v171
    %182 = vset.pattern.permute.xlu0 0
    %183 = vperm.xlu0 %182, %v172
    %v184 = vpop.permute.xlu0 %183
    %187 = vset.pattern.permute.xlu0 0
    %188 = vperm.xlu0 %187, %v173
    %v189 = vpop.permute.xlu0 %188
    %192 = vset.pattern.permute.xlu0 0
    %193 = vperm.xlu0 %192, %v174
    %v194 = vpop.permute.xlu0 %193
    %197 = vset.pattern.permute.xlu0 0
    %198 = vperm.xlu0 %197, %v175
    %v199 = vpop.permute.xlu0 %198
    %v201 = vmul.f32 %v184, %v177
    %v202 = vmul.f32 %v189, %v178
    %v203 = vmul.f32 %v194, %v179
    %v204 = vmul.f32 %v199, %v180
    %v205 = vadd.f32 %v201, %v202
    %v206 = vadd.f32 %v205, %v203
    %v207 = vadd.f32 %v206, %v204
    %v208 = vrot.slane %v207, 4
    %v209 = vadd.f32 %v207, %v208
    %v210 = vrot.slane %v209, 2
    %v211 = vadd.f32 %v209, %v210
    %v212 = vrot.slane %v211, 1
    %v213 = vadd.f32 %v211, %v212
    %215 = vset.pattern.permute.xlu0 0
    %216 = vperm.xlu0 %215, %v176
    %v217 = vpop.permute.xlu0 %216
    %v219 = vlaneseq
    %v220 = vshrl.u32 %v219, 7
    %v221 = vsub.s32 0, %v220
    %v222 = vrot.slane %v217, %v221
    %v223 = vadd.f32 %v213, %v222
    %224 = vst [vmem:[#allocation3] sm:$0x1] %v223
    // Predicated region
    $region22: #{tpu_custom_call.1} parent=1 // pred_check
      _
    $region23: #{tpu_custom_call.1} parent=1 // pred_check_branch
      %226 = sbr.rel (0) target = $region25
    $region24: #{tpu_custom_call.1} parent=1 // pred_region
      %s228 = ssub.s32 16, 16
      %229 = vsyncadd [#allocation4], %s228
      %s231 = sshll.u32 [#allocation3], 4
      %s232 = int_to_ptr.vmem [resolvable:$true] %s231
      %234 = dma.vmem_to_hbm [thread:$0]  %s232, 16, %s5, [#allocation4]
    $region25: #{tpu_custom_call.1} parent=1 // pred_fallthru
      _
    // Predicated region
    $region26: #{tpu_custom_call.1} parent=1 // pred_check
      _
    $region27: #{tpu_custom_call.1} parent=1 // pred_check_branch
      %236 = sbr.rel (0) target = $region29
    $region28: #{tpu_custom_call.1} parent=1 // pred_region
      %237 = dma.done [#allocation4], 16
    $region29: #{tpu_custom_call.1} parent=1 // pred_fallthru
      _
    %238 = vsyncpa [#allocation4], 1

</llo_original>
